<compile_context>
chip_gen: v7x
topology: tpu7x:2x2x1
jax: 0.10.0
libtpu: 0.0.40
codegen_flags: <defaults>
</compile_context>

<pallas_src>
import jax
import jax.numpy as jnp
from jax.experimental import pallas as pl
from jax.experimental.pallas import tpu as pltpu

KGE_SIZE = 32
LN_EPS = 1e-5  # torch.nn.LayerNorm default


def _disc_dw_kernel(x_ref, kge_ref, pat_t_ref, w0p_ref, w0k_ref, b0_ref,
                    gamma_ref, beta_ref, w1_ref, b1_ref, o_ref):
    # x_p = x @ patterns.T
    x_p = jnp.dot(x_ref[...], pat_t_ref[...],
                  preferred_element_type=jnp.float32)              # (B, P)
    # Linear0 on cat((x_p, kge), 1)  ==  x_p @ W0p + kge @ W0k + b0
    h = (jnp.dot(x_p, w0p_ref[...], preferred_element_type=jnp.float32)
         + jnp.dot(kge_ref[...], w0k_ref[...], preferred_element_type=jnp.float32)
         + b0_ref[...])                                            # (B, H)
    # LayerNorm over the hidden dim (biased variance, eps=1e-5, affine)
    mu = jnp.mean(h, axis=-1, keepdims=True)
    d = h - mu
    var = jnp.mean(d * d, axis=-1, keepdims=True)
    hn = d * jax.lax.rsqrt(var + LN_EPS) * gamma_ref[...] + beta_ref[...]
    # Linear1 (H -> 1) as a lane reduce, then sigmoid (EUP path)
    y = jnp.sum(hn * w1_ref[...], axis=-1, keepdims=True) + b1_ref[...]
    o_ref[...] = jax.nn.sigmoid(y)


def discriminator_dw_forward(x, kge, params):
    """x: (B, Dx) f32, kge: (B, KGE_SIZE) f32 -> (B, 1) f32."""
    B = x.shape[0]
    vmem = pl.BlockSpec(memory_space=pltpu.MemorySpace.VMEM)
    return pl.pallas_call(
        _disc_dw_kernel,
        out_shape=jax.ShapeDtypeStruct((B, 1), jnp.float32),
        in_specs=[vmem] * 10,
        out_specs=vmem,
    )(x, kge,
      params["pat_t"],                       # (Dx, P)   = dwr_patterns.T
      params["w0p_t"], params["w0k_t"],      # (P, H), (KGE, H)
      params["b0"],                          # (1, H)
      params["gamma"], params["beta"],       # (1, H), (1, H)
      params["w1"], params["b1"])            # (1, H), (1, 1)


def init_params(key, pattern_num=32, x_dim=20, hidden_size=8, kge_size=KGE_SIZE):
    """Deterministic params, stored in the layouts the kernel consumes.

    Correspondence with the torch module:
      dwr_patterns   : (pattern_num, x_dim)        -> pat_t = patterns.T
      linear0.weight : (hidden, pattern_num+kge)   -> w0p_t = W0[:, :P].T
                                                      w0k_t = W0[:, P:].T
      linear0.bias   : (hidden,)                   -> b0    = bias[None, :]
      norm.weight/.bias : (hidden,)                -> gamma/beta[None, :]
      linear1.weight : (1, hidden)                 -> w1
      linear1.bias   : (1,)                        -> b1[None, :]
    """
    ks = jax.random.split(key, 7)
    patterns = jax.random.normal(ks[0], (pattern_num, x_dim), jnp.float32)
    w0 = 0.1 * jax.random.normal(ks[1], (hidden_size, pattern_num + kge_size), jnp.float32)
    b0 = 0.1 * jax.random.normal(ks[2], (hidden_size,), jnp.float32)
    gamma = 1.0 + 0.1 * jax.random.normal(ks[3], (hidden_size,), jnp.float32)
    beta = 0.1 * jax.random.normal(ks[4], (hidden_size,), jnp.float32)
    w1 = 0.1 * jax.random.normal(ks[5], (1, hidden_size), jnp.float32)
    b1 = 0.1 * jax.random.normal(ks[6], (1,), jnp.float32)
    return {
        "pat_t": patterns.T,                                  # (x_dim, P)
        "w0p_t": w0[:, :pattern_num].T,                       # (P, H)
        "w0k_t": w0[:, pattern_num:].T,                       # (KGE, H)
        "b0": b0[None, :],                                    # (1, H)
        "gamma": gamma[None, :],                              # (1, H)
        "beta": beta[None, :],                                # (1, H)
        "w1": w1,                                             # (1, H)
        "b1": b1[None, :],                                    # (1, 1)
    }


# ---------------------------------------------------------------------------
# Pure-JAX reference (identical math, no Pallas) for a correctness check
# ---------------------------------------------------------------------------
def _forward_ref(x, kge, params):
    x_p = x @ params["pat_t"]
    h = x_p @ params["w0p_t"] + kge @ params["w0k_t"] + params["b0"]
    mu = jnp.mean(h, axis=-1, keepdims=True)
    var = jnp.mean((h - mu) ** 2, axis=-1, keepdims=True)
    hn = (h - mu) / jnp.sqrt(var + LN_EPS) * params["gamma"] + params["beta"]
    y = jnp.sum(hn * params["w1"], axis=-1, keepdims=True) + params["b1"]
    return jax.nn.sigmoid(y)


if __name__ == "__main__":
    # Small shapes consistent with Discriminator_DW: batch=2, pattern_num=32,
    # KGE_SIZE=32, hidden_size=8; x (days_in_weekday feature) dim = 20.
    B, Dx, P, H = 2, 20, 32, 8
    key = jax.random.PRNGKey(0)
    kx, kk, kp = jax.random.split(key, 3)
    x = jax.random.normal(kx, (B, Dx), jnp.float32)
    kge = jax.random.normal(kk, (B, KGE_SIZE), jnp.float32)
    params = init_params(kp, pattern_num=P, x_dim=Dx, hidden_size=H, kge_size=KGE_SIZE)

    out = jax.block_until_ready(discriminator_dw_forward(x, kge, params))
    ref = jax.block_until_ready(_forward_ref(x, kge, params))
    assert out.shape == (B, 1)
    assert jnp.allclose(out, ref, atol=1e-5, rtol=1e-5), (out, ref)
    print("KERNEL_OK")
</pallas_src>

<mosaic_0001>
module attributes {stable_mosaic.version = 11 : i64} {
  func.func @_disc_dw_kernel(%arg0: memref<2x20xf32, #tpu.memory_space<vmem>>, %arg1: memref<2x32xf32, #tpu.memory_space<vmem>>, %arg2: memref<20x32xf32, #tpu.memory_space<vmem>>, %arg3: memref<32x8xf32, #tpu.memory_space<vmem>>, %arg4: memref<32x8xf32, #tpu.memory_space<vmem>>, %arg5: memref<1x8xf32, #tpu.memory_space<vmem>>, %arg6: memref<1x8xf32, #tpu.memory_space<vmem>>, %arg7: memref<1x8xf32, #tpu.memory_space<vmem>>, %arg8: memref<1x8xf32, #tpu.memory_space<vmem>>, %arg9: memref<1x1xf32, #tpu.memory_space<vmem>>, %arg10: memref<2x1xf32, #tpu.memory_space<vmem>>) attributes {dimension_semantics = [], scalar_prefetch = 0 : i64, scratch_operands = 0 : i64, tpu.core_type = #tpu.core_type<tc>} {
    %c0 = arith.constant 0 : index
    %c0_0 = arith.constant 0 : index
    %0 = vector.load %arg0[%c0, %c0_0] : memref<2x20xf32, #tpu.memory_space<vmem>>, vector<2x20xf32>
    %c0_1 = arith.constant 0 : index
    %c0_2 = arith.constant 0 : index
    %1 = vector.load %arg2[%c0_1, %c0_2] : memref<20x32xf32, #tpu.memory_space<vmem>>, vector<20x32xf32>
    %cst = arith.constant dense<0.000000e+00> : vector<2x32xf32>
    %2 = tpu.matmul %0, %1, %cst {dimension_numbers = #tpu.dot_dimension_numbers<[1], [0], [0], [1], [0, 0, 1, 1], [], []>} : vector<2x20xf32>, vector<20x32xf32>, vector<2x32xf32> -> vector<2x32xf32>
    %c0_3 = arith.constant 0 : index
    %c0_4 = arith.constant 0 : index
    %3 = vector.load %arg3[%c0_3, %c0_4] : memref<32x8xf32, #tpu.memory_space<vmem>>, vector<32x8xf32>
    %cst_5 = arith.constant dense<0.000000e+00> : vector<2x8xf32>
    %4 = tpu.matmul %2, %3, %cst_5 {dimension_numbers = #tpu.dot_dimension_numbers<[1], [0], [0], [1], [0, 0, 1, 1], [], []>} : vector<2x32xf32>, vector<32x8xf32>, vector<2x8xf32> -> vector<2x8xf32>
    %c0_6 = arith.constant 0 : index
    %c0_7 = arith.constant 0 : index
    %5 = vector.load %arg1[%c0_6, %c0_7] : memref<2x32xf32, #tpu.memory_space<vmem>>, vector<2x32xf32>
    %c0_8 = arith.constant 0 : index
    %c0_9 = arith.constant 0 : index
    %6 = vector.load %arg4[%c0_8, %c0_9] : memref<32x8xf32, #tpu.memory_space<vmem>>, vector<32x8xf32>
    %cst_10 = arith.constant dense<0.000000e+00> : vector<2x8xf32>
    %7 = tpu.matmul %5, %6, %cst_10 {dimension_numbers = #tpu.dot_dimension_numbers<[1], [0], [0], [1], [0, 0, 1, 1], [], []>} : vector<2x32xf32>, vector<32x8xf32>, vector<2x8xf32> -> vector<2x8xf32>
    %8 = arith.addf %4, %7 : vector<2x8xf32>
    %c0_11 = arith.constant 0 : index
    %c0_12 = arith.constant 0 : index
    %9 = vector.load %arg5[%c0_11, %c0_12] : memref<1x8xf32, #tpu.memory_space<vmem>>, vector<1x8xf32>
    %10 = vector.broadcast %9 : vector<1x8xf32> to vector<2x8xf32>
    %11 = arith.addf %8, %10 : vector<2x8xf32>
    %cst_13 = arith.constant dense<0.000000e+00> : vector<2xf32>
    %12 = vector.multi_reduction <add>, %11, %cst_13 [1] : vector<2x8xf32> to vector<2xf32>
    %13 = vector.shape_cast %12 : vector<2xf32> to vector<2x1xf32>
    %cst_14 = arith.constant 8.000000e+00 : f32
    %14 = vector.broadcast %cst_14 : f32 to vector<2x1xf32>
    %15 = arith.divf %13, %14 : vector<2x1xf32>
    %16 = vector.broadcast %15 : vector<2x1xf32> to vector<2x8xf32>
    %17 = arith.subf %11, %16 : vector<2x8xf32>
    %18 = arith.mulf %17, %17 : vector<2x8xf32>
    %cst_15 = arith.constant dense<0.000000e+00> : vector<2xf32>
    %19 = vector.multi_reduction <add>, %18, %cst_15 [1] : vector<2x8xf32> to vector<2xf32>
    %20 = vector.shape_cast %19 : vector<2xf32> to vector<2x1xf32>
    %cst_16 = arith.constant 8.000000e+00 : f32
    %21 = vector.broadcast %cst_16 : f32 to vector<2x1xf32>
    %22 = arith.divf %20, %21 : vector<2x1xf32>
    %cst_17 = arith.constant 9.99999974E-6 : f32
    %23 = vector.broadcast %cst_17 : f32 to vector<2x1xf32>
    %24 = arith.addf %22, %23 : vector<2x1xf32>
    %25 = math.rsqrt %24 : vector<2x1xf32>
    %26 = vector.broadcast %25 : vector<2x1xf32> to vector<2x8xf32>
    %27 = arith.mulf %17, %26 : vector<2x8xf32>
    %c0_18 = arith.constant 0 : index
    %c0_19 = arith.constant 0 : index
    %28 = vector.load %arg6[%c0_18, %c0_19] : memref<1x8xf32, #tpu.memory_space<vmem>>, vector<1x8xf32>
    %29 = vector.broadcast %28 : vector<1x8xf32> to vector<2x8xf32>
    %30 = arith.mulf %27, %29 : vector<2x8xf32>
    %c0_20 = arith.constant 0 : index
    %c0_21 = arith.constant 0 : index
    %31 = vector.load %arg7[%c0_20, %c0_21] : memref<1x8xf32, #tpu.memory_space<vmem>>, vector<1x8xf32>
    %32 = vector.broadcast %31 : vector<1x8xf32> to vector<2x8xf32>
    %33 = arith.addf %30, %32 : vector<2x8xf32>
    %c0_22 = arith.constant 0 : index
    %c0_23 = arith.constant 0 : index
    %34 = vector.load %arg8[%c0_22, %c0_23] : memref<1x8xf32, #tpu.memory_space<vmem>>, vector<1x8xf32>
    %35 = vector.broadcast %34 : vector<1x8xf32> to vector<2x8xf32>
    %36 = arith.mulf %33, %35 : vector<2x8xf32>
    %cst_24 = arith.constant dense<0.000000e+00> : vector<2xf32>
    %37 = vector.multi_reduction <add>, %36, %cst_24 [1] : vector<2x8xf32> to vector<2xf32>
    %38 = vector.shape_cast %37 : vector<2xf32> to vector<2x1xf32>
    %c0_25 = arith.constant 0 : index
    %c0_26 = arith.constant 0 : index
    %39 = vector.load %arg9[%c0_25, %c0_26] : memref<1x1xf32, #tpu.memory_space<vmem>>, vector<1x1xf32>
    %40 = vector.broadcast %39 : vector<1x1xf32> to vector<2x1xf32>
    %41 = arith.addf %38, %40 : vector<2x1xf32>
    %42 = arith.negf %41 : vector<2x1xf32>
    %43 = math.exp %42 : vector<2x1xf32>
    %cst_27 = arith.constant 1.000000e+00 : f32
    %44 = vector.broadcast %cst_27 : f32 to vector<2x1xf32>
    %45 = arith.addf %44, %43 : vector<2x1xf32>
    %46 = arith.divf %44, %45 : vector<2x1xf32>
    %c0_28 = arith.constant 0 : index
    %c0_29 = arith.constant 0 : index
    %47 = vector.load %arg10[%c0_28, %c0_29] : memref<2x1xf32, #tpu.memory_space<vmem>>, vector<2x1xf32>
    tpu.vector_store %arg10[%c0_28, %c0_29], %46 {strides = array<i32>} : memref<2x1xf32, #tpu.memory_space<vmem>>, vector<2x1xf32>,
    return
  }
}

</mosaic_0001>

<llo_original>
// kernel: tpu_custom_call.1
$region0: #{tpu_custom_call.1}
  #allocation0 [shape = 'u32[]', space=smem, size = 0x4, offset = 0x4, fixed_abs, tag = 'smem constant byte address 0x4 - core index']
  #allocation1 [shape = 'u32[144,128]{1,0:T(1,128)}', space=vmem, size = 0x12000, scoped, tag = 'internal scratch']
  #allocation2 [shape = 'f32[1,1]{1,0:T(1,128)S(1)}', space=vmem, size = 0x200, scoped, tag = 'scoped memory for tpu_custom_call.1']
  %s0 = inlined_call_operand.vmem [shape: f32[2,20], index: 0, kind: input, shape index: {}]
  %s1 = inlined_call_operand.vmem [shape: f32[2,32], index: 1, kind: input, shape index: {}]
  %s2 = inlined_call_operand.vmem [shape: f32[20,32], index: 2, kind: input, shape index: {}]
  %s3 = inlined_call_operand.vmem [shape: f32[32,8], index: 3, kind: input, shape index: {}]
  %s4 = inlined_call_operand.vmem [shape: f32[32,8], index: 4, kind: input, shape index: {}]
  %s5 = inlined_call_operand.vmem [shape: f32[1,8], index: 5, kind: input, shape index: {}]
  %s6 = inlined_call_operand.vmem [shape: f32[1,8], index: 6, kind: input, shape index: {}]
  %s7 = inlined_call_operand.vmem [shape: f32[1,8], index: 7, kind: input, shape index: {}]
  %s8 = inlined_call_operand.vmem [shape: f32[1,8], index: 8, kind: input, shape index: {}]
  %s9 = inlined_call_operand.<no memory space> [shape: f32[1,1], index: 9, kind: input, shape index: {}]
  %s10 = inlined_call_operand.vmem [shape: f32[2,1], index: 10, kind: output, shape index: {}]
  %s11 = sld [smem:[#allocation0]]
  $region50: #{tpu_custom_call.1} parent=0
    _
  %s13 = ssub.s32 1, %s11
  %s14 = scalar_select 0, %s13, %s11
  %v15 = vstv %s9
  %16 = vst [vmem:[#allocation2] sm:$0x1] %v15
  // Predicated region
  $region2: #{tpu_custom_call.1} parent=0 // pred_check
    _
  $region3: #{tpu_custom_call.1} parent=0 // pred_check_branch
    %18 = sbr.rel (0) target = $region5
  $region4: #{tpu_custom_call.1} parent=0 // pred_region
    _
  $region5: #{tpu_custom_call.1} parent=0 // pred_fallthru
    _
  // Predicated region
  $region6: #{tpu_custom_call.1} parent=0 // pred_check
    _
  $region7: #{tpu_custom_call.1} parent=0 // pred_check_branch
    %20 = sbr.rel (0) target = $region9
  $region8: #{tpu_custom_call.1} parent=0 // pred_region
    _
  $region9: #{tpu_custom_call.1} parent=0 // pred_fallthru
    _
  // Predicated region
  $region10: #{tpu_custom_call.1} parent=0 // pred_check
    _
  $region11: #{tpu_custom_call.1} parent=0 // pred_check_branch
    %22 = sbr.rel (0) target = $region13
  $region12: #{tpu_custom_call.1} parent=0 // pred_region
    _
  $region13: #{tpu_custom_call.1} parent=0 // pred_fallthru
    _
  // Predicated region
  $region14: #{tpu_custom_call.1} parent=0 // pred_check
    _
  $region15: #{tpu_custom_call.1} parent=0 // pred_check_branch
    %24 = sbr.rel (0) target = $region17
  $region16: #{tpu_custom_call.1} parent=0 // pred_region
    _
  $region17: #{tpu_custom_call.1} parent=0 // pred_fallthru
    _
  // Predicated region
  $region18: #{tpu_custom_call.1} parent=0 // pred_check
    _
  $region19: #{tpu_custom_call.1} parent=0 // pred_check_branch
    %26 = sbr.rel (0) target = $region21
  $region20: #{tpu_custom_call.1} parent=0 // pred_region
    _
  $region21: #{tpu_custom_call.1} parent=0 // pred_fallthru
    _
  // Predicated region
  $region22: #{tpu_custom_call.1} parent=0 // pred_check
    _
  $region23: #{tpu_custom_call.1} parent=0 // pred_check_branch
    %28 = sbr.rel (0) target = $region25
  $region24: #{tpu_custom_call.1} parent=0 // pred_region
    _
  $region25: #{tpu_custom_call.1} parent=0 // pred_fallthru
    _
  // Predicated region
  $region26: #{tpu_custom_call.1} parent=0 // pred_check
    _
  $region27: #{tpu_custom_call.1} parent=0 // pred_check_branch
    %30 = sbr.rel (0) target = $region29
  $region28: #{tpu_custom_call.1} parent=0 // pred_region
    _
  $region29: #{tpu_custom_call.1} parent=0 // pred_fallthru
    _
  // Predicated region
  $region30: #{tpu_custom_call.1} parent=0 // pred_check
    _
  $region31: #{tpu_custom_call.1} parent=0 // pred_check_branch
    %32 = sbr.rel (0) target = $region33
  $region32: #{tpu_custom_call.1} parent=0 // pred_region
    _
  $region33: #{tpu_custom_call.1} parent=0 // pred_fallthru
    _
  // Predicated region
  $region34: #{tpu_custom_call.1} parent=0 // pred_check
    _
  $region35: #{tpu_custom_call.1} parent=0 // pred_check_branch
    %34 = sbr.rel (0) target = $region37
  $region36: #{tpu_custom_call.1} parent=0 // pred_region
    _
  $region37: #{tpu_custom_call.1} parent=0 // pred_fallthru
    _
  // Predicated region
  $region38: #{tpu_custom_call.1} parent=0 // pred_check
    _
  $region39: #{tpu_custom_call.1} parent=0 // pred_check_branch
    %36 = sbr.rel (0) target = $region41
  $region40: #{tpu_custom_call.1} parent=0 // pred_region
    _
  $region41: #{tpu_custom_call.1} parent=0 // pred_fallthru
    _
  %v37 = vld [vmem:[%s0] sm:$0x3]
  %v38 = vld [vmem:[%s2] sm:$0xff]
  %v39 = vld [vmem:[%s2 + $0x8] sm:$0xff]
  %v40 = vld [vmem:[%s2 + $0x10] sm:$0xf]
  %vm41 = vcmask 162816
  %v43 = vsel %vm41, %v37, 0
  %vm45 = vcmask 1043456
  %v47 = vsel %vm45, %v40, 0
  %49 = vmatprep.subr.mxu0 0.0
  %50 = vmatpush1.msra.mxu0 %v38
  %51 = vmatprep.subr.mxu0 0.0
  %52 = vmatpush1.msra.mxu0 %v39
  %53 = vmatprep.subr.mxu0 0.0
  %54 = vmatpush1.msra.mxu0 %v47
  %55 = vmatprep.subr.mxu0 0.0
  %56 = vmatpush1.msra.mxu0 0.0
  %57 = vmatprep.subr.mxu0 0.0
  %58 = vmatpush1.msra.mxu0 0.0
  %59 = vmatprep.subr.mxu0 0.0
  %60 = vmatpush1.msra.mxu0 0.0
  %61 = vmatprep.subr.mxu0 0.0
  %62 = vmatpush1.msra.mxu0 0.0
  %63 = vmatprep.subr.mxu0 0.0
  %64 = vmatpush1.msra.mxu0 0.0
  %65 = vmatprep.subr.mxu0 0.0
  %66 = vmatpush1.msra.mxu0 0.0
  %67 = vmatprep.subr.mxu0 0.0
  %68 = vmatpush1.msra.mxu0 0.0
  %69 = vmatprep.subr.mxu0 0.0
  %70 = vmatpush1.msra.mxu0 0.0
  %71 = vmatprep.subr.mxu0 0.0
  %72 = vmatpush1.msra.mxu0 0.0
  %73 = vmatprep.subr.mxu0 0.0
  %74 = vmatpush1.msra.mxu0 0.0
  %75 = vmatprep.subr.mxu0 0.0
  %76 = vmatpush1.msra.mxu0 0.0
  %77 = vmatprep.subr.mxu0 0.0
  %78 = vmatpush1.msra.mxu0 0.0
  %79 = vmatprep.subr.mxu0 0.0
  %80 = vmatpush1.msra.mxu0 0.0
  %81 = vmatprep.subr.mxu0 0.0
  %82 = vmatpush1.msra.mxu0 0.0
  %83 = vmatprep.subr.mxu0 0.0
  %84 = vmatpush1.msra.mxu0 0.0
  %85 = vmatprep.subr.mxu0 0.0
  %86 = vmatpush1.msra.mxu0 0.0
  %87 = vmatprep.subr.mxu0 0.0
  %88 = vmatpush1.msra.mxu0 0.0
  %89 = vmatprep.subr.mxu0 0.0
  %90 = vmatpush1.msra.mxu0 0.0
  %91 = vmatprep.subr.mxu0 0.0
  %92 = vmatpush1.msra.mxu0 0.0
  %93 = vmatprep.subr.mxu0 0.0
  %94 = vmatpush1.msra.mxu0 0.0
  %95 = vmatprep.subr.mxu0 0.0
  %96 = vmatpush1.msra.mxu0 0.0
  %97 = vmatprep.subr.mxu0 0.0
  %98 = vmatpush1.msra.mxu0 0.0
  %99 = vmatprep.subr.mxu0 0.0
  %100 = vmatpush1.msra.mxu0 0.0
  %101 = vmatprep.subr.mxu0 0.0
  %102 = vmatpush1.msra.mxu0 0.0
  %103 = vmatprep.subr.mxu0 0.0
  %104 = vmatpush1.msra.mxu0 0.0
  %105 = vmatprep.subr.mxu0 0.0
  %106 = vmatpush1.msra.mxu0 0.0
  %107 = vmatprep.subr.mxu0 0.0
  %108 = vmatpush1.msra.mxu0 0.0
  %109 = vmatprep.subr.mxu0 0.0
  %110 = vmatpush1.msra.mxu0 0.0
  %111 = vmatprep.subr.mxu0 0.0
  %112 = vmatpush1.msra.mxu0 0.0
  %113 = vmatprep.mubr.f32.mxu0 0.0
  %114 = vmatmul.mubr.f32.gmra.mrb[0].mxu0 %v43
  %v115 = vpop.f32.mrb[0].mxu0
  %v116 = vadd.f32 0.0, %v115
  %v117 = vpop.f32.mrb[0].mxu0
  %118 = vdwg.mxu0
  %v119 = vld [vmem:[%s3] sm:$0xff]
  %v120 = vld [vmem:[%s3 + $0x8] sm:$0xff]
  %v121 = vld [vmem:[%s3 + $0x10] sm:$0xff]
  %v122 = vld [vmem:[%s3 + $0x18] sm:$0xff]
  %v123 = vld [vmem:[%s1] sm:$0x3]
  %v124 = vld [vmem:[%s4] sm:$0xff]
  %v125 = vld [vmem:[%s4 + $0x8] sm:$0xff]
  %v126 = vld [vmem:[%s4 + $0x10] sm:$0xff]
  %v127 = vld [vmem:[%s4 + $0x18] sm:$0xff]
  %vm128 = vcmask 261120
  %v130 = vsel %vm128, %v123, 0
  %132 = vmatprep.subr.mxu0 0.0
  %133 = vmatpush1.msra.mxu0 %v124
  %134 = vmatprep.subr.mxu0 0.0
  %135 = vmatpush1.msra.mxu0 %v125
  %136 = vmatprep.subr.mxu0 0.0
  %137 = vmatpush1.msra.mxu0 %v126
  %138 = vmatprep.subr.mxu0 0.0
  %139 = vmatpush1.msra.mxu0 %v127
  %140 = vmatprep.subr.mxu0 0.0
  %141 = vmatpush1.msra.mxu0 0.0
  %142 = vmatprep.subr.mxu0 0.0
  %143 = vmatpush1.msra.mxu0 0.0
  %144 = vmatprep.subr.mxu0 0.0
  %145 = vmatpush1.msra.mxu0 0.0
  %146 = vmatprep.subr.mxu0 0.0
  %147 = vmatpush1.msra.mxu0 0.0
  %148 = vmatprep.subr.mxu0 0.0
  %149 = vmatpush1.msra.mxu0 0.0
  %150 = vmatprep.subr.mxu0 0.0
  %151 = vmatpush1.msra.mxu0 0.0
  %152 = vmatprep.subr.mxu0 0.0
  %153 = vmatpush1.msra.mxu0 0.0
  %154 = vmatprep.subr.mxu0 0.0
  %155 = vmatpush1.msra.mxu0 0.0
  %156 = vmatprep.subr.mxu0 0.0
  %157 = vmatpush1.msra.mxu0 0.0
  %158 = vmatprep.subr.mxu0 0.0
  %159 = vmatpush1.msra.mxu0 0.0
  %160 = vmatprep.subr.mxu0 0.0
  %161 = vmatpush1.msra.mxu0 0.0
  %162 = vmatprep.subr.mxu0 0.0
  %163 = vmatpush1.msra.mxu0 0.0
  %164 = vmatprep.subr.mxu0 0.0
  %165 = vmatpush1.msra.mxu0 0.0
  %166 = vmatprep.subr.mxu0 0.0
  %167 = vmatpush1.msra.mxu0 0.0
  %168 = vmatprep.subr.mxu0 0.0
  %169 = vmatpush1.msra.mxu0 0.0
  %170 = vmatprep.subr.mxu0 0.0
  %171 = vmatpush1.msra.mxu0 0.0
  %172 = vmatprep.subr.mxu0 0.0
  %173 = vmatpush1.msra.mxu0 0.0
  %174 = vmatprep.subr.mxu0 0.0
  %175 = vmatpush1.msra.mxu0 0.0
  %176 = vmatprep.subr.mxu0 0.0
  %177 = vmatpush1.msra.mxu0 0.0
  %178 = vmatprep.subr.mxu0 0.0
  %179 = vmatpush1.msra.mxu0 0.0
  %180 = vmatprep.subr.mxu0 0.0
  %181 = vmatpush1.msra.mxu0 0.0
  %182 = vmatprep.subr.mxu0 0.0
  %183 = vmatpush1.msra.mxu0 0.0
  %184 = vmatprep.subr.mxu0 0.0
  %185 = vmatpush1.msra.mxu0 0.0
  %186 = vmatprep.subr.mxu0 0.0
  %187 = vmatpush1.msra.mxu0 0.0
  %188 = vmatprep.subr.mxu0 0.0
  %189 = vmatpush1.msra.mxu0 0.0
  %190 = vmatprep.subr.mxu0 0.0
  %191 = vmatpush1.msra.mxu0 0.0
  %192 = vmatprep.subr.mxu0 0.0
  %193 = vmatpush1.msra.mxu0 0.0
  %194 = vmatprep.subr.mxu0 0.0
  %195 = vmatpush1.msra.mxu0 0.0
  %196 = vmatprep.mubr.f32.mxu0 0.0
  %197 = vmatmul.mubr.f32.gmra.mrb[0].mxu0 %v130
  %v198 = vpop.f32.mrb[0].mxu0
  %v199 = vadd.f32 0.0, %v198
  %v200 = vpop.f32.mrb[0].mxu0
  %201 = vdwg.mxu0
  %v203 = vsel %vm128, %v116, 0
  %205 = vmatprep.subr.mxu0 0.0
  %206 = vmatpush1.msra.mxu0 %v119
  %207 = vmatprep.subr.mxu0 0.0
  %208 = vmatpush1.msra.mxu0 %v120
  %209 = vmatprep.subr.mxu0 0.0
  %210 = vmatpush1.msra.mxu0 %v121
  %211 = vmatprep.subr.mxu0 0.0
  %212 = vmatpush1.msra.mxu0 %v122
  %213 = vmatprep.subr.mxu0 0.0
  %214 = vmatpush1.msra.mxu0 0.0
  %215 = vmatprep.subr.mxu0 0.0
  %216 = vmatpush1.msra.mxu0 0.0
  %217 = vmatprep.subr.mxu0 0.0
  %218 = vmatpush1.msra.mxu0 0.0
  %219 = vmatprep.subr.mxu0 0.0
  %220 = vmatpush1.msra.mxu0 0.0
  %221 = vmatprep.subr.mxu0 0.0
  %222 = vmatpush1.msra.mxu0 0.0
  %223 = vmatprep.subr.mxu0 0.0
  %224 = vmatpush1.msra.mxu0 0.0
  %225 = vmatprep.subr.mxu0 0.0
  %226 = vmatpush1.msra.mxu0 0.0
  %227 = vmatprep.subr.mxu0 0.0
  %228 = vmatpush1.msra.mxu0 0.0
  %229 = vmatprep.subr.mxu0 0.0
  %230 = vmatpush1.msra.mxu0 0.0
  %231 = vmatprep.subr.mxu0 0.0
  %232 = vmatpush1.msra.mxu0 0.0
  %233 = vmatprep.subr.mxu0 0.0
  %234 = vmatpush1.msra.mxu0 0.0
  %235 = vmatprep.subr.mxu0 0.0
  %236 = vmatpush1.msra.mxu0 0.0
  %237 = vmatprep.subr.mxu0 0.0
  %238 = vmatpush1.msra.mxu0 0.0
  %239 = vmatprep.subr.mxu0 0.0
  %240 = vmatpush1.msra.mxu0 0.0
  %241 = vmatprep.subr.mxu0 0.0
  %242 = vmatpush1.msra.mxu0 0.0
  %243 = vmatprep.subr.mxu0 0.0
  %244 = vmatpush1.msra.mxu0 0.0
  %245 = vmatprep.subr.mxu0 0.0
  %246 = vmatpush1.msra.mxu0 0.0
  %247 = vmatprep.subr.mxu0 0.0
  %248 = vmatpush1.msra.mxu0 0.0
  %249 = vmatprep.subr.mxu0 0.0
  %250 = vmatpush1.msra.mxu0 0.0
  %251 = vmatprep.subr.mxu0 0.0
  %252 = vmatpush1.msra.mxu0 0.0
  %253 = vmatprep.subr.mxu0 0.0
  %254 = vmatpush1.msra.mxu0 0.0
  %255 = vmatprep.subr.mxu0 0.0
  %256 = vmatpush1.msra.mxu0 0.0
  %257 = vmatprep.subr.mxu0 0.0
  %258 = vmatpush1.msra.mxu0 0.0
  %259 = vmatprep.subr.mxu0 0.0
  %260 = vmatpush1.msra.mxu0 0.0
  %261 = vmatprep.subr.mxu0 0.0
  %262 = vmatpush1.msra.mxu0 0.0
  %263 = vmatprep.subr.mxu0 0.0
  %264 = vmatpush1.msra.mxu0 0.0
  %265 = vmatprep.subr.mxu0 0.0
  %266 = vmatpush1.msra.mxu0 0.0
  %267 = vmatprep.subr.mxu0 0.0
  %268 = vmatpush1.msra.mxu0 0.0
  %269 = vmatprep.mubr.f32.mxu0 0.0
  %270 = vmatmul.mubr.f32.gmra.mrb[0].mxu0 %v203
  %v271 = vpop.f32.mrb[0].mxu0
  %v272 = vadd.f32 %v199, %v271
  %v273 = vpop.f32.mrb[0].mxu0
  %274 = vdwg.mxu0
  %v275 = vld [vmem:[%s5] sm:$0x1]
  %v277 = vlaneseq
  %v278 = vshrl.u32 %v277, 7
  %v279 = vsub.s32 0, %v278
  %v280 = vrot.slane %v275, %v279
  %v282 = vadd.f32 %v272, %v280
  %vm283 = vcmask 58368
  %v284 = vsel %vm283, %v282, 0.0
  %285 = vadd.xlane.f32.xlu0 %v284
  %v286 = vpop.xlane.xlu0 %285
  %v287 = vrcp.pop 8.0
  %v288 = vmul.f32 %v286, %v287
  %v289 = vsub.f32 %v282, %v288
  %v290 = vmul.f32 %v289, %v289
  %v291 = vsel %vm283, %v290, 0.0
  %292 = vadd.xlane.f32.xlu0 %v291
  %v293 = vpop.xlane.xlu0 %292
  %v294 = vmul.f32 %v293, %v287
  %v295 = vadd.f32 %v294, 1e-05
  %v296 = vrsqrt.pop %v295
  %v297 = vmul.f32 %v289, %v296
  %v298 = vld [vmem:[%s6] sm:$0x1]
  %v300 = vlaneseq
  %v301 = vshrl.u32 %v300, 7
  %v302 = vsub.s32 0, %v301
  %v303 = vrot.slane %v298, %v302
  %v305 = vmul.f32 %v297, %v303
  %v306 = vld [vmem:[%s7] sm:$0x1]
  %v308 = vlaneseq
  %v309 = vshrl.u32 %v308, 7
  %v310 = vsub.s32 0, %v309
  %v311 = vrot.slane %v306, %v310
  %v313 = vadd.f32 %v305, %v311
  %v314 = vld [vmem:[%s8] sm:$0x1]
  %v316 = vlaneseq
  %v317 = vshrl.u32 %v316, 7
  %v318 = vsub.s32 0, %v317
  %v319 = vrot.slane %v314, %v318
  %v321 = vmul.f32 %v313, %v319
  %v322 = vsel %vm283, %v321, 0.0
  %323 = vadd.xlane.f32.xlu0 %v322
  %v324 = vpop.xlane.xlu0 %323
  %v325 = vld [vmem:[#allocation2] sm:$0x1]
  %v327 = vlaneseq
  %v328 = vshrl.u32 %v327, 7
  %v329 = vsub.s32 0, %v328
  %v330 = vrot.slane %v325, %v329
  %v332 = vadd.f32 %v324, %v330
  %v333 = vxor.u32 %v332, 2147483648
  %v334 = vmul.f32 %v333, 1.442695
  %v335 = vpow.pop %v334
  %v336 = vadd.f32 %v335, 1.0
  %v337 = vrcp.pop %v336
  %v338 = vmul.f32 1.0, %v337
  %vm339 = vcmask 1024
  %340 = vst.msk [vmem:[%s10] sm:$0x3] %vm339, %v338
  // Predicated region
  $region42: #{tpu_custom_call.1} parent=0 // pred_check
    _
  $region43: #{tpu_custom_call.1} parent=0 // pred_check_branch
    %342 = sbr.rel (0) target = $region45
  $region44: #{tpu_custom_call.1} parent=0 // pred_region
    _
  $region45: #{tpu_custom_call.1} parent=0 // pred_fallthru
    _
  // Predicated region
  $region46: #{tpu_custom_call.1} parent=0 // pred_check
    _
  $region47: #{tpu_custom_call.1} parent=0 // pred_check_branch
    %344 = sbr.rel (0) target = $region49
  $region48: #{tpu_custom_call.1} parent=0 // pred_region
    _
  $region49: #{tpu_custom_call.1} parent=0 // pred_fallthru
    _

</llo_original>
